<compile_context>
chip_gen: v7x
topology: tpu7x:2x2x1
jax: 0.10.0
libtpu: 0.0.40
codegen_flags: <defaults>
</compile_context>

<pallas_src>
import jax
import jax.numpy as jnp
from jax.experimental import pallas as pl
from jax.experimental.pallas import tpu as pltpu  # noqa: F401


def _attention_pool(h, w1, b1, w2, b2):
    """Shared body: returns (M, A) = ((K, L), (K, N)) in f32."""
    # fc1 + tanh  (MXU + EUP)
    z = jnp.tanh(jnp.dot(h, w1, preferred_element_type=jnp.float32) + b1)      # (N, D)
    # fc2, produced directly in (K, N) layout (rhs-transposed dot) + per-head bias
    logits = jnp.einsum("kd,nd->kn", w2, z,
                        preferred_element_type=jnp.float32) + b2               # (K, N)
    # numerically stable softmax over the instance (lane) axis
    logits = logits - jnp.max(logits, axis=-1, keepdims=True)
    e = jnp.exp(logits)
    a = e / jnp.sum(e, axis=-1, keepdims=True)                                 # (K, N)
    m = jnp.dot(a, h, preferred_element_type=jnp.float32)                      # (K, L)
    return m, a


def _head_kernel(h_ref, w1_ref, b1_ref, w2_ref, b2_ref, y_ref, a_ref):
    m, a = _attention_pool(h_ref[...], w1_ref[...], b1_ref[...],
                           w2_ref[...], b2_ref[...])
    a_ref[...] = a.astype(a_ref.dtype)
    y_ref[...] = m.astype(y_ref.dtype)


def _head_classifier_kernel(h_ref, w1_ref, b1_ref, w2_ref, b2_ref,
                            wc_ref, bc_ref, y_ref, a_ref):
    m, a = _attention_pool(h_ref[...], w1_ref[...], b1_ref[...],
                           w2_ref[...], b2_ref[...])
    a_ref[...] = a.astype(a_ref.dtype)
    y = jnp.dot(m, wc_ref[...], preferred_element_type=jnp.float32) + bc_ref[...]  # (K, C)
    y_ref[...] = y.astype(y_ref.dtype)


def attention_classification_head(x, w1, b1, w2, b2, wc=None, bc=None):
    """Fused AttentionClassificationHead.forward.

    x  : (N, L)    bag of N instance embeddings.
    w1 : (L, D)    attention fc1 weight (transposed vs PyTorch's (D, L)).
    b1 : (D,)
    w2 : (K, D)    attention fc2 weight (PyTorch-native layout).
    b2 : (K,)
    wc : (L*K, C)  optional classifier weight (transposed vs PyTorch's (C, L*K)).
    bc : (C,)      optional classifier bias.
    Returns (Y_hat, A): Y_hat is (K, C) with a classifier, else (K, L); A is (K, N).
    """
    N, L = x.shape
    D = w1.shape[1]
    K = w2.shape[0]
    assert w1.shape == (L, D) and b1.shape == (D,)
    assert w2.shape == (K, D) and b2.shape == (K,)

    def full(shape):
        n = len(shape)
        return pl.BlockSpec(shape, lambda i, _n=n: (0,) * _n)

    in_specs = [full((N, L)), full((L, D)), full((1, D)), full((K, D)), full((K, 1))]
    args = [x, w1, b1.reshape(1, D), w2, b2.reshape(K, 1)]

    if wc is not None:
        # TODO(synk): the original module's classifier is nn.Linear(L*K, C) applied to M of
        # shape (K, L), which is only shape-consistent for K == 1; same restriction here.
        assert K == 1 and bc is not None and wc.shape[0] == L * K
        C = wc.shape[1]
        kernel = _head_classifier_kernel
        in_specs += [full((L * K, C)), full((1, C))]
        args += [wc, bc.reshape(1, C)]
        y_shape = (K, C)
    else:
        kernel = _head_kernel
        y_shape = (K, L)

    out_shape = (jax.ShapeDtypeStruct(y_shape, x.dtype),
                 jax.ShapeDtypeStruct((K, N), x.dtype))
    out_specs = (full(y_shape), full((K, N)))

    # Single grid step: at these shapes the kernel is launch/overhead bound, so keep
    # one fused invocation (no pipelining, no dimension_semantics).
    return pl.pallas_call(
        kernel,
        out_shape=out_shape,
        grid=(1,),
        in_specs=in_specs,
        out_specs=out_specs,
    )(*args)


def _reference(x, w1, b1, w2, b2, wc=None, bc=None):
    """Pure-JAX mirror of the PyTorch forward (same weight layouts as the kernel)."""
    a_logits = jnp.tanh(x @ w1 + b1) @ w2.T + b2        # (N, K)
    a = jax.nn.softmax(a_logits.T, axis=1)              # (K, N)
    m = a @ x                                            # (K, L)
    if wc is not None:
        return m @ wc + bc, a
    return m, a


if __name__ == "__main__":
    key = jax.random.PRNGKey(0)
    ks = jax.random.split(key, 8)

    # Small, lane-friendly shapes: bag of N=16 instances, L=128 features, D=32 hidden.
    N, L, D = 16, 128, 32

    def uinit(k, shape, fan_in):
        bound = 1.0 / (fan_in ** 0.5)
        return jax.random.uniform(k, shape, minval=-bound, maxval=bound, dtype=jnp.float32)

    x = jax.random.normal(ks[0], (N, L), dtype=jnp.float32)
    w1 = uinit(ks[1], (L, D), L)
    b1 = uinit(ks[2], (D,), L)

    # --- config 1: multi-head pooling head (num_classes=None, K=2) ---
    K1 = 2
    w2 = uinit(ks[3], (K1, D), D)
    b2 = uinit(ks[4], (K1,), D)

    y1, a1 = attention_classification_head(x, w1, b1, w2, b2)
    (y1, a1) = jax.block_until_ready((y1, a1))
    ry1, ra1 = _reference(x, w1, b1, w2, b2)
    assert jnp.allclose(y1, ry1, atol=1e-4, rtol=1e-4), "M mismatch (no classifier)"
    assert jnp.allclose(a1, ra1, atol=1e-4, rtol=1e-4), "A mismatch (no classifier)"

    # --- config 2: single head + classifier (K=1, num_classes=4) ---
    K2, C = 1, 4
    w2b = uinit(ks[5], (K2, D), D)
    b2b = uinit(ks[6], (K2,), D)
    wc = uinit(ks[7], (L * K2, C), L * K2)
    bc = jnp.zeros((C,), jnp.float32)

    y2, a2 = attention_classification_head(x, w1, b1, w2b, b2b, wc, bc)
    (y2, a2) = jax.block_until_ready((y2, a2))
    ry2, ra2 = _reference(x, w1, b1, w2b, b2b, wc, bc)
    assert jnp.allclose(y2, ry2, atol=1e-4, rtol=1e-4), "Y_hat mismatch (classifier)"
    assert jnp.allclose(a2, ra2, atol=1e-4, rtol=1e-4), "A mismatch (classifier)"

    print("KERNEL_OK")
</pallas_src>

<mosaic_0001>
module attributes {stable_mosaic.version = 11 : i64} {
  func.func @_head_kernel(%arg0: i32, %arg1: memref<16x128xf32, #tpu.memory_space<vmem>>, %arg2: memref<128x32xf32, #tpu.memory_space<vmem>>, %arg3: memref<1x32xf32, #tpu.memory_space<vmem>>, %arg4: memref<2x32xf32, #tpu.memory_space<vmem>>, %arg5: memref<2x1xf32, #tpu.memory_space<vmem>>, %arg6: memref<2x128xf32, #tpu.memory_space<vmem>>, %arg7: memref<2x16xf32, #tpu.memory_space<vmem>>) attributes {dimension_semantics = [#tpu.dimension_semantics<arbitrary>], iteration_bounds = array<i64: 1>, scalar_prefetch = 0 : i64, scratch_operands = 0 : i64, tpu.core_type = #tpu.core_type<tc>, window_params = [{pipeline_mode = #tpu.pipeline_mode<synchronous>, transform_indices = @transform_0, window_bounds = array<i64: 16, 128>}, {pipeline_mode = #tpu.pipeline_mode<synchronous>, transform_indices = @transform_1, window_bounds = array<i64: 128, 32>}, {pipeline_mode = #tpu.pipeline_mode<synchronous>, transform_indices = @transform_2, window_bounds = array<i64: 1, 32>}, {pipeline_mode = #tpu.pipeline_mode<synchronous>, transform_indices = @transform_3, window_bounds = array<i64: 2, 32>}, {pipeline_mode = #tpu.pipeline_mode<synchronous>, transform_indices = @transform_4, window_bounds = array<i64: 2, 1>}, {pipeline_mode = #tpu.pipeline_mode<synchronous>, transform_indices = @transform_5, window_bounds = array<i64: 2, 128>}, {pipeline_mode = #tpu.pipeline_mode<synchronous>, transform_indices = @transform_6, window_bounds = array<i64: 2, 16>}]} {
    %c0 = arith.constant 0 : index
    %c0_0 = arith.constant 0 : index
    %0 = vector.load %arg1[%c0, %c0_0] : memref<16x128xf32, #tpu.memory_space<vmem>>, vector<16x128xf32>
    %c0_1 = arith.constant 0 : index
    %c0_2 = arith.constant 0 : index
    %1 = vector.load %arg2[%c0_1, %c0_2] : memref<128x32xf32, #tpu.memory_space<vmem>>, vector<128x32xf32>
    %c0_3 = arith.constant 0 : index
    %c0_4 = arith.constant 0 : index
    %2 = vector.load %arg3[%c0_3, %c0_4] : memref<1x32xf32, #tpu.memory_space<vmem>>, vector<1x32xf32>
    %c0_5 = arith.constant 0 : index
    %c0_6 = arith.constant 0 : index
    %3 = vector.load %arg4[%c0_5, %c0_6] : memref<2x32xf32, #tpu.memory_space<vmem>>, vector<2x32xf32>
    %c0_7 = arith.constant 0 : index
    %c0_8 = arith.constant 0 : index
    %4 = vector.load %arg5[%c0_7, %c0_8] : memref<2x1xf32, #tpu.memory_space<vmem>>, vector<2x1xf32>
    %cst = arith.constant dense<0.000000e+00> : vector<16x32xf32>
    %5 = tpu.matmul %0, %1, %cst {dimension_numbers = #tpu.dot_dimension_numbers<[1], [0], [0], [1], [0, 0, 1, 1], [], []>} : vector<16x128xf32>, vector<128x32xf32>, vector<16x32xf32> -> vector<16x32xf32>
    %6 = vector.broadcast %2 : vector<1x32xf32> to vector<16x32xf32>
    %7 = arith.addf %5, %6 : vector<16x32xf32>
    %8 = math.tanh %7 : vector<16x32xf32>
    "tpu.trace_start"() <{level = 10 : i32, message = "kd,nd->kn"}> : () -> ()
    %cst_9 = arith.constant dense<0.000000e+00> : vector<2x16xf32>
    %9 = tpu.matmul %3, %8, %cst_9 {dimension_numbers = #tpu.dot_dimension_numbers<[1], [1], [0], [0], [0, 0, 1, 0], [], []>} : vector<2x32xf32>, vector<16x32xf32>, vector<2x16xf32> -> vector<2x16xf32>
    "tpu.trace_stop"() : () -> ()
    %10 = vector.broadcast %4 : vector<2x1xf32> to vector<2x16xf32>
    %11 = arith.addf %9, %10 : vector<2x16xf32>
    %cst_10 = arith.constant dense<0xFF800000> : vector<2xf32>
    %12 = vector.multi_reduction <maximumf>, %11, %cst_10 [1] : vector<2x16xf32> to vector<2xf32>
    %13 = vector.shape_cast %12 : vector<2xf32> to vector<2x1xf32>
    %14 = vector.broadcast %13 : vector<2x1xf32> to vector<2x16xf32>
    %15 = arith.subf %11, %14 : vector<2x16xf32>
    %16 = math.exp %15 : vector<2x16xf32>
    %cst_11 = arith.constant dense<0.000000e+00> : vector<2xf32>
    %17 = vector.multi_reduction <add>, %16, %cst_11 [1] : vector<2x16xf32> to vector<2xf32>
    %18 = vector.shape_cast %17 : vector<2xf32> to vector<2x1xf32>
    %19 = vector.broadcast %18 : vector<2x1xf32> to vector<2x16xf32>
    %20 = arith.divf %16, %19 : vector<2x16xf32>
    %cst_12 = arith.constant dense<0.000000e+00> : vector<2x128xf32>
    %21 = tpu.matmul %20, %0, %cst_12 {dimension_numbers = #tpu.dot_dimension_numbers<[1], [0], [0], [1], [0, 0, 1, 1], [], []>} : vector<2x16xf32>, vector<16x128xf32>, vector<2x128xf32> -> vector<2x128xf32>
    %c0_13 = arith.constant 0 : index
    %c0_14 = arith.constant 0 : index
    %22 = vector.load %arg7[%c0_13, %c0_14] : memref<2x16xf32, #tpu.memory_space<vmem>>, vector<2x16xf32>
    tpu.vector_store %arg7[%c0_13, %c0_14], %20 {strides = array<i32>} : memref<2x16xf32, #tpu.memory_space<vmem>>, vector<2x16xf32>,
    %c0_15 = arith.constant 0 : index
    %c0_16 = arith.constant 0 : index
    %23 = vector.load %arg6[%c0_15, %c0_16] : memref<2x128xf32, #tpu.memory_space<vmem>>, vector<2x128xf32>
    tpu.vector_store %arg6[%c0_15, %c0_16], %21 {strides = array<i32>} : memref<2x128xf32, #tpu.memory_space<vmem>>, vector<2x128xf32>,
    return
  }
  func.func @transform_0(%arg0: i32) -> (i32, i32) {
    %c0_i32 = arith.constant 0 : i32
    %c0_i32_0 = arith.constant 0 : i32
    %c0_i32_1 = arith.constant 0 : i32
    return %c0_i32, %c0_i32_0 : i32, i32
  }
  func.func @transform_1(%arg0: i32) -> (i32, i32) {
    %c0_i32 = arith.constant 0 : i32
    %c0_i32_0 = arith.constant 0 : i32
    %c0_i32_1 = arith.constant 0 : i32
    return %c0_i32, %c0_i32_0 : i32, i32
  }
  func.func @transform_2(%arg0: i32) -> (i32, i32) {
    %c0_i32 = arith.constant 0 : i32
    %c0_i32_0 = arith.constant 0 : i32
    %c0_i32_1 = arith.constant 0 : i32
    return %c0_i32, %c0_i32_0 : i32, i32
  }
  func.func @transform_3(%arg0: i32) -> (i32, i32) {
    %c0_i32 = arith.constant 0 : i32
    %c0_i32_0 = arith.constant 0 : i32
    %c0_i32_1 = arith.constant 0 : i32
    return %c0_i32, %c0_i32_0 : i32, i32
  }
  func.func @transform_4(%arg0: i32) -> (i32, i32) {
    %c0_i32 = arith.constant 0 : i32
    %c0_i32_0 = arith.constant 0 : i32
    %c0_i32_1 = arith.constant 0 : i32
    return %c0_i32, %c0_i32_0 : i32, i32
  }
  func.func @transform_5(%arg0: i32) -> (i32, i32) {
    %c0_i32 = arith.constant 0 : i32
    %c0_i32_0 = arith.constant 0 : i32
    %c0_i32_1 = arith.constant 0 : i32
    return %c0_i32, %c0_i32_0 : i32, i32
  }
  func.func @transform_6(%arg0: i32) -> (i32, i32) {
    %c0_i32 = arith.constant 0 : i32
    %c0_i32_0 = arith.constant 0 : i32
    %c0_i32_1 = arith.constant 0 : i32
    return %c0_i32, %c0_i32_0 : i32, i32
  }
}

</mosaic_0001>

<llo_original>
// kernel: tpu_custom_call.1
$region0: #{tpu_custom_call.1}
  #allocation0 [shape = 'u32[]', space=smem, size = 0x4, offset = 0x4, fixed_abs, tag = 'smem constant byte address 0x4 - core index']
  #allocation1 [shape = 'u32[144,128]{1,0:T(1,128)}', space=vmem, size = 0x12000, scoped, tag = 'internal scratch']
  %s0 = inlined_call_operand.vmem [shape: f32[16,128], index: 0, kind: input, shape index: {}]
  %s1 = inlined_call_operand.vmem [shape: f32[128,32], index: 1, kind: input, shape index: {}]
  %s2 = inlined_call_operand.vmem [shape: f32[1,32], index: 2, kind: input, shape index: {}]
  %s3 = inlined_call_operand.vmem [shape: f32[2,32], index: 3, kind: input, shape index: {}]
  %s4 = inlined_call_operand.vmem [shape: f32[2,1], index: 4, kind: input, shape index: {}]
  %s5 = inlined_call_operand.hbm [shape: f32[2,128], index: 5, kind: output, shape index: {0}]
  %s6 = inlined_call_operand.hbm [shape: f32[2,16], index: 6, kind: output, shape index: {1}]
  %7 = xla_tuple %s5, %s6
  %s8 = sld [smem:[#allocation0]]
  $region38: #{tpu_custom_call.1} parent=0
    _
  %s10 = ssub.s32 1, %s8
  %s11 = scalar_select 0, %s10, %s8
  $region1: #{tpu_custom_call.1} parent=0
    #allocation2 [shape = 'u8[1024]{0}', space=vmem, size = 0x400, scoped, tag = 'output window, operand 0, single buffered']
    #allocation3 [shape = 's32[1]{0}', space=sflag, size = 0x4, scoped, tag = 'scoped memory for tpu_custom_call.1']
    #allocation4 [shape = 'u8[1024]{0}', space=vmem, size = 0x400, scoped, tag = 'output window, operand 1, single buffered']
    #allocation5 [shape = 's32[1]{0}', space=sflag, size = 0x4, scoped, tag = 'scoped memory for tpu_custom_call.1']
    %12 = vsyncpa [#allocation3], 0
    %13 = vsyncpa [#allocation5], 0
    // Predicated region
    $region2: #{tpu_custom_call.1} parent=1 // pred_check
      _
    $region3: #{tpu_custom_call.1} parent=1 // pred_check_branch
      %15 = sbr.rel (0) target = $region5
    $region4: #{tpu_custom_call.1} parent=1 // pred_region
      _
    $region5: #{tpu_custom_call.1} parent=1 // pred_fallthru
      _
    // Predicated region
    $region6: #{tpu_custom_call.1} parent=1 // pred_check
      _
    $region7: #{tpu_custom_call.1} parent=1 // pred_check_branch
      %17 = sbr.rel (0) target = $region9
    $region8: #{tpu_custom_call.1} parent=1 // pred_region
      _
    $region9: #{tpu_custom_call.1} parent=1 // pred_fallthru
      _
    // Predicated region
    $region10: #{tpu_custom_call.1} parent=1 // pred_check
      _
    $region11: #{tpu_custom_call.1} parent=1 // pred_check_branch
      %19 = sbr.rel (0) target = $region13
    $region12: #{tpu_custom_call.1} parent=1 // pred_region
      _
    $region13: #{tpu_custom_call.1} parent=1 // pred_fallthru
      _
    // Predicated region
    $region14: #{tpu_custom_call.1} parent=1 // pred_check
      _
    $region15: #{tpu_custom_call.1} parent=1 // pred_check_branch
      %21 = sbr.rel (0) target = $region17
    $region16: #{tpu_custom_call.1} parent=1 // pred_region
      _
    $region17: #{tpu_custom_call.1} parent=1 // pred_fallthru
      _
    // Predicated region
    $region18: #{tpu_custom_call.1} parent=1 // pred_check
      _
    $region19: #{tpu_custom_call.1} parent=1 // pred_check_branch
      %23 = sbr.rel (0) target = $region21
    $region20: #{tpu_custom_call.1} parent=1 // pred_region
      _
    $region21: #{tpu_custom_call.1} parent=1 // pred_fallthru
      _
    %v24 = vld [vmem:[%s0] sm:$0xff]
    %v25 = vld [vmem:[%s0 + $0x8] sm:$0xff]
    %v26 = vld [vmem:[%s1] sm:$0xff]
    %v27 = vld [vmem:[%s1 + $0x8] sm:$0xff]
    %v28 = vld [vmem:[%s1 + $0x10] sm:$0xff]
    %v29 = vld [vmem:[%s1 + $0x18] sm:$0xff]
    %v30 = vld [vmem:[%s1 + $0x20] sm:$0xff]
    %v31 = vld [vmem:[%s1 + $0x28] sm:$0xff]
    %v32 = vld [vmem:[%s1 + $0x30] sm:$0xff]
    %v33 = vld [vmem:[%s1 + $0x38] sm:$0xff]
    %v34 = vld [vmem:[%s1 + $0x40] sm:$0xff]
    %v35 = vld [vmem:[%s1 + $0x48] sm:$0xff]
    %v36 = vld [vmem:[%s1 + $0x50] sm:$0xff]
    %v37 = vld [vmem:[%s1 + $0x58] sm:$0xff]
    %v38 = vld [vmem:[%s1 + $0x60] sm:$0xff]
    %v39 = vld [vmem:[%s1 + $0x68] sm:$0xff]
    %v40 = vld [vmem:[%s1 + $0x70] sm:$0xff]
    %v41 = vld [vmem:[%s1 + $0x78] sm:$0xff]
    %v42 = vld [vmem:[%s2] sm:$0x1]
    %v43 = vld [vmem:[%s3] sm:$0x3]
    %v44 = vld [vmem:[%s4] sm:$0x3]
    %v46 = vlaneseq
    %v47 = vshrl.u32 %v46, 7
    %v48 = vsub.s32 0, %v47
    %v49 = vrot.slane %v42, %v48
    %51 = vmatprep.subr.mxu0 0.0
    %52 = vmatpush1.msra.mxu0 %v26
    %53 = vmatprep.subr.mxu0 0.0
    %54 = vmatpush1.msra.mxu0 %v27
    %55 = vmatprep.subr.mxu0 0.0
    %56 = vmatpush1.msra.mxu0 %v28
    %57 = vmatprep.subr.mxu0 0.0
    %58 = vmatpush1.msra.mxu0 %v29
    %59 = vmatprep.subr.mxu0 0.0
    %60 = vmatpush1.msra.mxu0 %v30
    %61 = vmatprep.subr.mxu0 0.0
    %62 = vmatpush1.msra.mxu0 %v31
    %63 = vmatprep.subr.mxu0 0.0
    %64 = vmatpush1.msra.mxu0 %v32
    %65 = vmatprep.subr.mxu0 0.0
    %66 = vmatpush1.msra.mxu0 %v33
    %67 = vmatprep.subr.mxu0 0.0
    %68 = vmatpush1.msra.mxu0 %v34
    %69 = vmatprep.subr.mxu0 0.0
    %70 = vmatpush1.msra.mxu0 %v35
    %71 = vmatprep.subr.mxu0 0.0
    %72 = vmatpush1.msra.mxu0 %v36
    %73 = vmatprep.subr.mxu0 0.0
    %74 = vmatpush1.msra.mxu0 %v37
    %75 = vmatprep.subr.mxu0 0.0
    %76 = vmatpush1.msra.mxu0 %v38
    %77 = vmatprep.subr.mxu0 0.0
    %78 = vmatpush1.msra.mxu0 %v39
    %79 = vmatprep.subr.mxu0 0.0
    %80 = vmatpush1.msra.mxu0 %v40
    %81 = vmatprep.subr.mxu0 0.0
    %82 = vmatpush1.msra.mxu0 %v41
    %83 = vmatprep.subr.mxu0 0.0
    %84 = vmatpush1.msra.mxu0 0.0
    %85 = vmatprep.subr.mxu0 0.0
    %86 = vmatpush1.msra.mxu0 0.0
    %87 = vmatprep.subr.mxu0 0.0
    %88 = vmatpush1.msra.mxu0 0.0
    %89 = vmatprep.subr.mxu0 0.0
    %90 = vmatpush1.msra.mxu0 0.0
    %91 = vmatprep.subr.mxu0 0.0
    %92 = vmatpush1.msra.mxu0 0.0
    %93 = vmatprep.subr.mxu0 0.0
    %94 = vmatpush1.msra.mxu0 0.0
    %95 = vmatprep.subr.mxu0 0.0
    %96 = vmatpush1.msra.mxu0 0.0
    %97 = vmatprep.subr.mxu0 0.0
    %98 = vmatpush1.msra.mxu0 0.0
    %99 = vmatprep.subr.mxu0 0.0
    %100 = vmatpush1.msra.mxu0 0.0
    %101 = vmatprep.subr.mxu0 0.0
    %102 = vmatpush1.msra.mxu0 0.0
    %103 = vmatprep.subr.mxu0 0.0
    %104 = vmatpush1.msra.mxu0 0.0
    %105 = vmatprep.subr.mxu0 0.0
    %106 = vmatpush1.msra.mxu0 0.0
    %107 = vmatprep.subr.mxu0 0.0
    %108 = vmatpush1.msra.mxu0 0.0
    %109 = vmatprep.subr.mxu0 0.0
    %110 = vmatpush1.msra.mxu0 0.0
    %111 = vmatprep.subr.mxu0 0.0
    %112 = vmatpush1.msra.mxu0 0.0
    %113 = vmatprep.subr.mxu0 0.0
    %114 = vmatpush1.msra.mxu0 0.0
    %115 = vmatprep.mubr.f32.mxu0 0.0
    %116 = vmatmul.mubr.f32.gmra.mrb[0].mxu0 %v24
    %v117 = vpop.f32.mrb[0].mxu0
    %v118 = vadd.f32 %v49, %v117
    %v119 = vpop.f32.mrb[0].mxu0
    %120 = vmatprep.mubr.f32.mxu0 0.0
    %121 = vmatmul.mubr.f32.gmra.mrb[0].mxu0 %v25
    %v122 = vpop.f32.mrb[0].mxu0
    %v123 = vadd.f32 %v49, %v122
    %v124 = vpop.f32.mrb[0].mxu0
    %125 = vdwg.mxu0
    %v126 = vtanh.pop %v118
    %v127 = vtanh.pop %v123
    %129 = vset.pattern.permute.xlu0 0
    %130 = vperm.xlu0 %129, %v44
    %v131 = vpop.permute.xlu0 %130
    %vm133 = vcmask 261120
    %v135 = vsel %vm133, %v43, 0
    %v138 = vsel %vm133, %v126, 0
    %v141 = vsel %vm133, %v127, 0
    %143 = vmatprep.subr.mxu0 0.0
    %144 = vmatpush1.xpose.msra.mxu0 %v138
    %145 = vmatprep.subr.mxu0 0.0
    %146 = vmatpush1.xpose.msra.mxu0 %v141
    %147 = vmatprep.subr.mxu0 0.0
    %148 = vmatpush1.xpose.msra.mxu0 0.0
    %149 = vmatprep.subr.mxu0 0.0
    %150 = vmatpush1.xpose.msra.mxu0 0.0
    %151 = vmatprep.subr.mxu0 0.0
    %152 = vmatpush1.xpose.msra.mxu0 0.0
    %153 = vmatprep.subr.mxu0 0.0
    %154 = vmatpush1.xpose.msra.mxu0 0.0
    %155 = vmatprep.subr.mxu0 0.0
    %156 = vmatpush1.xpose.msra.mxu0 0.0
    %157 = vmatprep.subr.mxu0 0.0
    %158 = vmatpush1.xpose.msra.mxu0 0.0
    %159 = vmatprep.subr.mxu0 0.0
    %160 = vmatpush1.xpose.msra.mxu0 0.0
    %161 = vmatprep.subr.mxu0 0.0
    %162 = vmatpush1.xpose.msra.mxu0 0.0
    %163 = vmatprep.subr.mxu0 0.0
    %164 = vmatpush1.xpose.msra.mxu0 0.0
    %165 = vmatprep.subr.mxu0 0.0
    %166 = vmatpush1.xpose.msra.mxu0 0.0
    %167 = vmatprep.subr.mxu0 0.0
    %168 = vmatpush1.xpose.msra.mxu0 0.0
    %169 = vmatprep.subr.mxu0 0.0
    %170 = vmatpush1.xpose.msra.mxu0 0.0
    %171 = vmatprep.subr.mxu0 0.0
    %172 = vmatpush1.xpose.msra.mxu0 0.0
    %173 = vmatprep.subr.mxu0 0.0
    %174 = vmatpush1.xpose.msra.mxu0 0.0
    %175 = vmatprep.subr.mxu0 0.0
    %176 = vmatpush1.xpose.msra.mxu0 0.0
    %177 = vmatprep.subr.mxu0 0.0
    %178 = vmatpush1.xpose.msra.mxu0 0.0
    %179 = vmatprep.subr.mxu0 0.0
    %180 = vmatpush1.xpose.msra.mxu0 0.0
    %181 = vmatprep.subr.mxu0 0.0
    %182 = vmatpush1.xpose.msra.mxu0 0.0
    %183 = vmatprep.subr.mxu0 0.0
    %184 = vmatpush1.xpose.msra.mxu0 0.0
    %185 = vmatprep.subr.mxu0 0.0
    %186 = vmatpush1.xpose.msra.mxu0 0.0
    %187 = vmatprep.subr.mxu0 0.0
    %188 = vmatpush1.xpose.msra.mxu0 0.0
    %189 = vmatprep.subr.mxu0 0.0
    %190 = vmatpush1.xpose.msra.mxu0 0.0
    %191 = vmatprep.subr.mxu0 0.0
    %192 = vmatpush1.xpose.msra.mxu0 0.0
    %193 = vmatprep.subr.mxu0 0.0
    %194 = vmatpush1.xpose.msra.mxu0 0.0
    %195 = vmatprep.subr.mxu0 0.0
    %196 = vmatpush1.xpose.msra.mxu0 0.0
    %197 = vmatprep.subr.mxu0 0.0
    %198 = vmatpush1.xpose.msra.mxu0 0.0
    %199 = vmatprep.subr.mxu0 0.0
    %200 = vmatpush1.xpose.msra.mxu0 0.0
    %201 = vmatprep.subr.mxu0 0.0
    %202 = vmatpush1.xpose.msra.mxu0 0.0
    %203 = vmatprep.subr.mxu0 0.0
    %204 = vmatpush1.xpose.msra.mxu0 0.0
    %205 = vmatprep.subr.mxu0 0.0
    %206 = vmatpush1.xpose.msra.mxu0 0.0
    %207 = vmatprep.mubr.f32.mxu0 0.0
    %208 = vmatmul.mubr.f32.gmra.mrb[0].mxu0 %v135
    %v209 = vpop.f32.mrb[0].mxu0
    %v210 = vadd.f32 %v131, %v209
    %v211 = vpop.f32.mrb[0].mxu0
    %212 = vdwg.mxu0
    %vm213 = vcmask 123904
    %v214 = vsel %vm213, %v210, -inf
    %215 = vmax.xlane.f32.xlu0 %v214
    %v216 = vpop.xlane.xlu0 %215
    %v217 = vsub.f32 %v210, %v216
    %v218 = vmul.f32 %v217, 1.442695
    %v219 = vpow.pop %v218
    %v220 = vsel %vm213, %v219, 0.0
    %221 = vadd.xlane.f32.xlu0 %v220
    %v222 = vpop.xlane.xlu0 %221
    %v223 = vrcp.pop %v222
    %v224 = vmul.f32 %v219, %v223
    %vm225 = vcmask 130048
    %v227 = vsel %vm225, %v224, 0
    %229 = vmatprep.subr.mxu0 0.0
    %230 = vmatpush1.msra.mxu0 %v24
    %231 = vmatprep.subr.mxu0 0.0
    %232 = vmatpush1.msra.mxu0 %v25
    %233 = vmatprep.subr.mxu0 0.0
    %234 = vmatpush1.msra.mxu0 0.0
    %235 = vmatprep.subr.mxu0 0.0
    %236 = vmatpush1.msra.mxu0 0.0
    %237 = vmatprep.subr.mxu0 0.0
    %238 = vmatpush1.msra.mxu0 0.0
    %239 = vmatprep.subr.mxu0 0.0
    %240 = vmatpush1.msra.mxu0 0.0
    %241 = vmatprep.subr.mxu0 0.0
    %242 = vmatpush1.msra.mxu0 0.0
    %243 = vmatprep.subr.mxu0 0.0
    %244 = vmatpush1.msra.mxu0 0.0
    %245 = vmatprep.subr.mxu0 0.0
    %246 = vmatpush1.msra.mxu0 0.0
    %247 = vmatprep.subr.mxu0 0.0
    %248 = vmatpush1.msra.mxu0 0.0
    %249 = vmatprep.subr.mxu0 0.0
    %250 = vmatpush1.msra.mxu0 0.0
    %251 = vmatprep.subr.mxu0 0.0
    %252 = vmatpush1.msra.mxu0 0.0
    %253 = vmatprep.subr.mxu0 0.0
    %254 = vmatpush1.msra.mxu0 0.0
    %255 = vmatprep.subr.mxu0 0.0
    %256 = vmatpush1.msra.mxu0 0.0
    %257 = vmatprep.subr.mxu0 0.0
    %258 = vmatpush1.msra.mxu0 0.0
    %259 = vmatprep.subr.mxu0 0.0
    %260 = vmatpush1.msra.mxu0 0.0
    %261 = vmatprep.subr.mxu0 0.0
    %262 = vmatpush1.msra.mxu0 0.0
    %263 = vmatprep.subr.mxu0 0.0
    %264 = vmatpush1.msra.mxu0 0.0
    %265 = vmatprep.subr.mxu0 0.0
    %266 = vmatpush1.msra.mxu0 0.0
    %267 = vmatprep.subr.mxu0 0.0
    %268 = vmatpush1.msra.mxu0 0.0
    %269 = vmatprep.subr.mxu0 0.0
    %270 = vmatpush1.msra.mxu0 0.0
    %271 = vmatprep.subr.mxu0 0.0
    %272 = vmatpush1.msra.mxu0 0.0
    %273 = vmatprep.subr.mxu0 0.0
    %274 = vmatpush1.msra.mxu0 0.0
    %275 = vmatprep.subr.mxu0 0.0
    %276 = vmatpush1.msra.mxu0 0.0
    %277 = vmatprep.subr.mxu0 0.0
    %278 = vmatpush1.msra.mxu0 0.0
    %279 = vmatprep.subr.mxu0 0.0
    %280 = vmatpush1.msra.mxu0 0.0
    %281 = vmatprep.subr.mxu0 0.0
    %282 = vmatpush1.msra.mxu0 0.0
    %283 = vmatprep.subr.mxu0 0.0
    %284 = vmatpush1.msra.mxu0 0.0
    %285 = vmatprep.subr.mxu0 0.0
    %286 = vmatpush1.msra.mxu0 0.0
    %287 = vmatprep.subr.mxu0 0.0
    %288 = vmatpush1.msra.mxu0 0.0
    %289 = vmatprep.subr.mxu0 0.0
    %290 = vmatpush1.msra.mxu0 0.0
    %291 = vmatprep.subr.mxu0 0.0
    %292 = vmatpush1.msra.mxu0 0.0
    %293 = vmatprep.mubr.f32.mxu0 0.0
    %294 = vmatmul.mubr.f32.gmra.mrb[0].mxu0 %v227
    %v295 = vpop.f32.mrb[0].mxu0
    %v296 = vadd.f32 0.0, %v295
    %v297 = vpop.f32.mrb[0].mxu0
    %298 = vdwg.mxu0
    %299 = vst.msk [vmem:[#allocation4] sm:$0x3] %vm213, %v224
    %300 = vst [vmem:[#allocation2] sm:$0x3] %v296
    // Predicated region
    $region22: #{tpu_custom_call.1} parent=1 // pred_check
      _
    $region23: #{tpu_custom_call.1} parent=1 // pred_check_branch
      %302 = sbr.rel (0) target = $region25
    $region24: #{tpu_custom_call.1} parent=1 // pred_region
      %s304 = ssub.s32 32, 32
      %305 = vsyncadd [#allocation3], %s304
      %s307 = sshll.u32 [#allocation2], 4
      %s308 = int_to_ptr.vmem [resolvable:$true] %s307
      %310 = dma.vmem_to_hbm [thread:$0]  %s308, 32, %s5, [#allocation3]
    $region25: #{tpu_custom_call.1} parent=1 // pred_fallthru
      _
    // Predicated region
    $region26: #{tpu_custom_call.1} parent=1 // pred_check
      _
    $region27: #{tpu_custom_call.1} parent=1 // pred_check_branch
      %312 = sbr.rel (0) target = $region29
    $region28: #{tpu_custom_call.1} parent=1 // pred_region
      %s314 = ssub.s32 32, 32
      %315 = vsyncadd [#allocation5], %s314
      %s317 = sshll.u32 [#allocation4], 4
      %s318 = int_to_ptr.vmem [resolvable:$true] %s317
      %320 = dma.vmem_to_hbm [thread:$0]  %s318, 32, %s6, [#allocation5]
    $region29: #{tpu_custom_call.1} parent=1 // pred_fallthru
      _
    // Predicated region
    $region30: #{tpu_custom_call.1} parent=1 // pred_check
      _
    $region31: #{tpu_custom_call.1} parent=1 // pred_check_branch
      %322 = sbr.rel (0) target = $region33
    $region32: #{tpu_custom_call.1} parent=1 // pred_region
      %323 = dma.done [#allocation3], 32
    $region33: #{tpu_custom_call.1} parent=1 // pred_fallthru
      _
    // Predicated region
    $region34: #{tpu_custom_call.1} parent=1 // pred_check
      _
    $region35: #{tpu_custom_call.1} parent=1 // pred_check_branch
      %325 = sbr.rel (0) target = $region37
    $region36: #{tpu_custom_call.1} parent=1 // pred_region
      %326 = dma.done [#allocation5], 32
    $region37: #{tpu_custom_call.1} parent=1 // pred_fallthru
      _
    %327 = vsyncpa [#allocation3], 1
    %328 = vsyncpa [#allocation5], 1

</llo_original>
